<compile_context>
chip_gen: v7x
topology: tpu7x:2x2x1
jax: 0.10.0
libtpu: 0.0.40
codegen_flags: <defaults>
</compile_context>

<pallas_src>
import jax
import jax.numpy as jnp
import numpy as np
from jax.experimental import pallas as pl
from jax.experimental.pallas import tpu as pltpu


# ---------------------------------------------------------------------------
# Kernel: relu -> bf16 MXU matmul (block-diag weight, BN scale folded) -> +shift
# ---------------------------------------------------------------------------
def _shortcut_kernel(x_ref, w_ref, shift_ref, o_ref):
    # x_ref:  (TM, 2*Cin)  bf16   stacked [h1 | h2] rows (pre-relu)
    # w_ref:  (2*Cin, Cout) bf16  block-diagonal, BN scale folded per column
    # shift_ref: (1, Cout) f32    folded BN shift
    h = jnp.maximum(x_ref[...], 0.0)                       # relu (stays bf16)
    y = jnp.dot(h, w_ref[...], preferred_element_type=jnp.float32)
    o_ref[...] = y + shift_ref[...]                        # f32 epilogue


def shortcut_forward(params, x_nchw, stride, *, tm=64):
    """Pallas forward of the Shortcut module (eval-mode BatchNorm)."""
    N, Cin, H, W = x_nchw.shape
    co2 = params['w1'].shape[0]
    Cout = 2 * co2
    eps = 1e-5

    # Fold BatchNorm (eval mode) into per-channel scale/shift.
    # TODO(synk): training-mode BatchNorm (batch statistics + running-stat
    # update) is not implemented; eval-mode folded affine only.
    scale = params['gamma'] / jnp.sqrt(params['var'] + eps)
    shift = params['beta'] - params['mean'] * scale

    # NCHW -> NHWC (channels on the 128-lane axis).
    x = jnp.transpose(x_nchw, (0, 2, 3, 1))
    s = stride
    # avg_pool2d(h, 1, stride) == strided subsample; relu commutes with it and
    # with the zero pad (relu(0)=0), so relu is done inside the kernel.
    h1 = x[:, ::s, ::s, :]                                              # branch 1
    h2 = jnp.pad(x[:, 1:, 1:, :],                                       # F.pad(h,(-1,1,-1,1))
                 ((0, 0), (0, 1), (0, 1), (0, 0)))[:, ::s, ::s, :]      # branch 2
    Ho, Wo = h1.shape[1], h1.shape[2]

    # Stack the two branch inputs along channels -> one lane-dense 2D matrix.
    a = jnp.concatenate([h1, h2], axis=-1).reshape(N * Ho * Wo, 2 * Cin)
    a = a.astype(jnp.bfloat16)                                          # bf16 MXU operand

    # Block-diagonal weight (2*Cin, Cout) with BN scale folded per out-channel.
    w1 = params['w1'][:, :, 0, 0].T                                     # (Cin, co2)
    w2 = params['w2'][:, :, 0, 0].T
    wb = jnp.zeros((2 * Cin, Cout), jnp.float32)
    wb = wb.at[:Cin, :co2].set(w1).at[Cin:, co2:].set(w2)
    wb = (wb * scale[None, :]).astype(jnp.bfloat16)
    shift2d = shift.reshape(1, Cout).astype(jnp.float32)

    # Tile over M rows (sublane axis); pad M to a multiple of tm if needed.
    M = N * Ho * Wo
    K = 2 * Cin
    Mp = ((M + tm - 1) // tm) * tm
    if Mp != M:
        a = jnp.pad(a, ((0, Mp - M), (0, 0)))

    out2d = pl.pallas_call(
        _shortcut_kernel,
        out_shape=jax.ShapeDtypeStruct((Mp, Cout), jnp.float32),
        grid=(Mp // tm,),
        in_specs=[
            pl.BlockSpec((tm, K), lambda m: (m, 0)),
            pl.BlockSpec((K, Cout), lambda m: (0, 0)),
            pl.BlockSpec((1, Cout), lambda m: (0, 0)),
        ],
        out_specs=pl.BlockSpec((tm, Cout), lambda m: (m, 0)),
        compiler_params=pltpu.CompilerParams(dimension_semantics=("parallel",)),
    )(a, wb, shift2d)

    y = out2d[:M].reshape(N, Ho, Wo, Cout)
    return jnp.transpose(y, (0, 3, 1, 2))                               # NHWC -> NCHW


# ---------------------------------------------------------------------------
# Deterministic parameter init (mirrors shapes of the PyTorch module).
# ---------------------------------------------------------------------------
def init_shortcut_params(key, in_ch, out_ch):
    assert out_ch % 2 == 0
    co2 = out_ch // 2
    k1, k2, k3 = jax.random.split(key, 3)
    w1 = jax.random.normal(k1, (co2, in_ch, 1, 1), jnp.float32) / np.sqrt(in_ch)
    w2 = jax.random.normal(k2, (co2, in_ch, 1, 1), jnp.float32) / np.sqrt(in_ch)
    ka, kb, kc, kd = jax.random.split(k3, 4)
    gamma = 1.0 + 0.1 * jax.random.normal(ka, (out_ch,), jnp.float32)
    beta = 0.1 * jax.random.normal(kb, (out_ch,), jnp.float32)
    mean = 0.1 * jax.random.normal(kc, (out_ch,), jnp.float32)
    var = jax.random.uniform(kd, (out_ch,), jnp.float32, minval=0.5, maxval=1.5)
    return dict(w1=w1, w2=w2, gamma=gamma, beta=beta, mean=mean, var=var)


# ---------------------------------------------------------------------------
# Pure-JAX references.
#  * conv_dtype=None        : exact f32 PyTorch semantics (conv then BN).
#  * conv_dtype=jnp.bfloat16: matched precision (same casts/folding as kernel).
# ---------------------------------------------------------------------------
def reference_forward(params, x_nchw, stride, conv_dtype=None):
    eps = 1e-5
    scale = params['gamma'] / jnp.sqrt(params['var'] + eps)
    shift = params['beta'] - params['mean'] * scale
    s = stride
    h = jax.nn.relu(x_nchw)
    h1 = h[:, :, ::s, ::s]
    h2 = jnp.pad(h[:, :, 1:, 1:], ((0, 0), (0, 0), (0, 1), (0, 1)))[:, :, ::s, ::s]
    w1 = params['w1'][:, :, 0, 0]                       # (co2, Cin)
    w2 = params['w2'][:, :, 0, 0]
    co2 = w1.shape[0]
    if conv_dtype is None:
        y1 = jnp.einsum('nchw,oc->nohw', h1, w1)
        y2 = jnp.einsum('nchw,oc->nohw', h2, w2)
        y = jnp.concatenate([y1, y2], axis=1)
        return y * scale[None, :, None, None] + shift[None, :, None, None]
    # matched-precision path (fold scale, cast to bf16, f32 accumulation)
    w1s = (w1 * scale[:co2, None]).astype(conv_dtype)
    w2s = (w2 * scale[co2:, None]).astype(conv_dtype)
    y1 = jnp.einsum('nchw,oc->nohw', h1.astype(conv_dtype), w1s,
                    preferred_element_type=jnp.float32)
    y2 = jnp.einsum('nchw,oc->nohw', h2.astype(conv_dtype), w2s,
                    preferred_element_type=jnp.float32)
    y = jnp.concatenate([y1, y2], axis=1)
    return y + shift[None, :, None, None]


if __name__ == "__main__":
    key = jax.random.PRNGKey(0)
    kp, kx = jax.random.split(key)

    # Small but MXU/lane-friendly demo: in_ch=64, out_ch=128, stride=2.
    N, Cin, H, W = 4, 64, 16, 16
    Cout, stride = 128, 2
    params = init_shortcut_params(kp, Cin, Cout)
    x = jax.random.normal(kx, (N, Cin, H, W), jnp.float32)

    out = shortcut_forward(params, x, stride)
    out = jax.block_until_ready(out)
    assert out.shape == (N, Cout, H // stride, W // stride)

    # Exact kernel check vs. a matched-precision (bf16 MXU, f32 accum) reference.
    ref_bf16 = reference_forward(params, x, stride, conv_dtype=jnp.bfloat16)
    np.testing.assert_allclose(np.asarray(out), np.asarray(ref_bf16),
                               rtol=1e-4, atol=1e-4)

    # Semantics check vs. exact f32 PyTorch-style math (bf16-rounding tolerance).
    ref_f32 = reference_forward(params, x, stride)
    np.testing.assert_allclose(np.asarray(out), np.asarray(ref_f32),
                               rtol=5e-2, atol=5e-2)

    print("KERNEL_OK")
</pallas_src>

<mosaic_0001>
module attributes {stable_mosaic.version = 11 : i64} {
  func.func @_shortcut_kernel(%arg0: i32, %arg1: memref<64x128xbf16, #tpu.memory_space<vmem>>, %arg2: memref<128x128xbf16, #tpu.memory_space<vmem>>, %arg3: memref<1x128xf32, #tpu.memory_space<vmem>>, %arg4: memref<64x128xf32, #tpu.memory_space<vmem>>) attributes {dimension_semantics = [#tpu.dimension_semantics<parallel>], iteration_bounds = array<i64: 4>, scalar_prefetch = 0 : i64, scratch_operands = 0 : i64, tpu.core_type = #tpu.core_type<tc>, window_params = [{transform_indices = @transform_0, window_bounds = array<i64: 64, 128>}, {pipeline_mode = #tpu.pipeline_mode<synchronous>, transform_indices = @transform_1, window_bounds = array<i64: 128, 128>}, {pipeline_mode = #tpu.pipeline_mode<synchronous>, transform_indices = @transform_2, window_bounds = array<i64: 1, 128>}, {transform_indices = @transform_3, window_bounds = array<i64: 64, 128>}]} {
    %c0 = arith.constant 0 : index
    %c0_0 = arith.constant 0 : index
    %0 = vector.load %arg1[%c0, %c0_0] : memref<64x128xbf16, #tpu.memory_space<vmem>>, vector<64x128xbf16>
    %cst = arith.constant 0.000000e+00 : bf16
    %1 = vector.broadcast %cst : bf16 to vector<64x128xbf16>
    %2 = arith.maximumf %0, %1 : vector<64x128xbf16>
    %c0_1 = arith.constant 0 : index
    %c0_2 = arith.constant 0 : index
    %3 = vector.load %arg2[%c0_1, %c0_2] : memref<128x128xbf16, #tpu.memory_space<vmem>>, vector<128x128xbf16>
    %cst_3 = arith.constant dense<0.000000e+00> : vector<64x128xf32>
    %4 = tpu.matmul %2, %3, %cst_3 {dimension_numbers = #tpu.dot_dimension_numbers<[1], [0], [0], [1], [0, 0, 1, 1], [], []>} : vector<64x128xbf16>, vector<128x128xbf16>, vector<64x128xf32> -> vector<64x128xf32>
    %c0_4 = arith.constant 0 : index
    %c0_5 = arith.constant 0 : index
    %5 = vector.load %arg3[%c0_4, %c0_5] : memref<1x128xf32, #tpu.memory_space<vmem>>, vector<1x128xf32>
    %6 = vector.broadcast %5 : vector<1x128xf32> to vector<64x128xf32>
    %7 = arith.addf %4, %6 : vector<64x128xf32>
    %c0_6 = arith.constant 0 : index
    %c0_7 = arith.constant 0 : index
    %8 = vector.load %arg4[%c0_6, %c0_7] : memref<64x128xf32, #tpu.memory_space<vmem>>, vector<64x128xf32>
    tpu.vector_store %arg4[%c0_6, %c0_7], %7 {strides = array<i32>} : memref<64x128xf32, #tpu.memory_space<vmem>>, vector<64x128xf32>,
    return
  }
  func.func @transform_0(%arg0: i32) -> (i32, i32) {
    %c0_i32 = arith.constant 0 : i32
    %c0_i32_0 = arith.constant 0 : i32
    return %arg0, %c0_i32 : i32, i32
  }
  func.func @transform_1(%arg0: i32) -> (i32, i32) {
    %c0_i32 = arith.constant 0 : i32
    %c0_i32_0 = arith.constant 0 : i32
    %c0_i32_1 = arith.constant 0 : i32
    return %c0_i32, %c0_i32_0 : i32, i32
  }
  func.func @transform_2(%arg0: i32) -> (i32, i32) {
    %c0_i32 = arith.constant 0 : i32
    %c0_i32_0 = arith.constant 0 : i32
    %c0_i32_1 = arith.constant 0 : i32
    return %c0_i32, %c0_i32_0 : i32, i32
  }
  func.func @transform_3(%arg0: i32) -> (i32, i32) {
    %c0_i32 = arith.constant 0 : i32
    %c0_i32_0 = arith.constant 0 : i32
    return %arg0, %c0_i32 : i32, i32
  }
}

</mosaic_0001>

<llo_original>
// kernel: tpu_custom_call.1
$region0: #{tpu_custom_call.1}
  #allocation0 [shape = 'u32[]', space=smem, size = 0x4, offset = 0x4, fixed_abs, tag = 'smem constant byte address 0x4 - core index']
  #allocation1 [shape = 'u32[144,128]{1,0:T(1,128)}', space=vmem, size = 0x12000, scoped, tag = 'internal scratch']
  %s0 = inlined_call_operand.hbm [shape: bf16[256,128], index: 0, kind: input, shape index: {}]
  %s1 = inlined_call_operand.hbm [shape: bf16[128,128], index: 1, kind: input, shape index: {}]
  %s2 = inlined_call_operand.vmem [shape: f32[1,128], index: 2, kind: input, shape index: {}]
  %s3 = inlined_call_operand.hbm [shape: f32[256,128], index: 3, kind: output, shape index: {}]
  %s4 = sld [smem:[#allocation0]]
  $region53: #{tpu_custom_call.1} parent=0
    _
  %s6 = ssub.s32 1, %s4
  %s7 = scalar_select 0, %s6, %s4
  $region1: #{tpu_custom_call.1} parent=0
    #allocation2 [shape = 'u8[32768]{0}', space=vmem, size = 0x8000, scoped, tag = 'input window, operand 0']
    #allocation3 [shape = 's32[2]{0}', space=sflag, size = 0x8, scoped, tag = 'scoped memory for tpu_custom_call.1']
    #allocation4 [shape = 's32[2]{0}', space=sflag, size = 0x8, scoped, tag = 'scoped memory for tpu_custom_call.1']
    #allocation5 [shape = 'u8[32768]{0}', space=vmem, size = 0x8000, scoped, tag = 'input window, operand 1, single buffered']
    #allocation6 [shape = 's32[1]{0}', space=sflag, size = 0x4, scoped, tag = 'scoped memory for tpu_custom_call.1']
    #allocation7 [shape = 'u8[65536]{0}', space=vmem, size = 0x10000, scoped, tag = 'output window, operand 0']
    %8 = vsyncpa [#allocation3], 0
    %s9 = scalar_lea.sflag [#allocation3], 1
    %10 = vsyncpa %s9, 0
    %11 = vsyncpa [#allocation6], 0
    %12 = vsyncpa [#allocation4], 0
    %s13 = scalar_lea.sflag [#allocation4], 1
    %14 = vsyncpa %s13, 0
    loop: start=0, step=1, limit=6
    $region2: #{tpu_custom_call.1} parent=1 // loop_pre_header
      _
    $region3: #{tpu_custom_call.1} parent=1 // loop_header
      %s16 = sphi 0, %s20
      %p17 = scmp.ge.s32.totalorder %s16, 6
      %s26 = sphi 0, %s28
      %s29 = sphi 0, %s26
      %s30 = sphi 0, %s29
      %s46 = sphi 0, %s30
      %s50 = sphi 0, %s50
      %s52 = sphi 0, %s50
      %s53 = sphi 0, %s52
      %s67 = sphi 0, %s53
      %s71 = sphi 0, %s71
      %s73 = sphi 0, %s71
      %s74 = sphi 0, %s73
      %s88 = sphi 0, %s74
      %s94 = sphi 0, %s96
      %s97 = sphi 0, %s94
      %s98 = sphi 0, %s97
      %s114 = sphi 0, %s98
    $region4: #{tpu_custom_call.1} parent=1 // loop_header_branch
      %19 = sbr.rel (%p17) target = $region8
    $region5: #{tpu_custom_call.1} parent=1 // loop_body
      %s21 = ssub.s32 %s16, 1
      %s22 = ssub.s32 %s16, 2
      %s23 = sadd.s32 %s16, 1
      %s24 = ssub.s32 %s16, %s23
      %p25 = scmp.eq.s32.totalorder %s24, 0
      %s27 = sadd.s32 %s26, 1
      %s28 = scalar_select %p25, %s26, %s27
      %p31 = pneg %p25
      %p32 = scmp.eq.s32.totalorder %s16, 3
      %p33 = por %p31, %p32
      %p34 = scmp.ne.s32.totalorder %s26, %s29
      %p35 = scmp.eq.s32.totalorder %s16, 0
      %p36 = por %p34, %p35
      %p37 = scmp.ne.s32.totalorder %s26, %s29
      %p38 = scmp.eq.s32.totalorder %s21, 3
      %p39 = por %p37, %p38
      %p40 = scmp.ne.s32.totalorder %s29, %s30
      %p41 = scmp.eq.s32.totalorder %s21, 0
      %p42 = por %p40, %p41
      %p43 = scmp.ne.s32.totalorder %s29, %s30
      %p44 = scmp.eq.s32.totalorder %s22, 3
      %p45 = por %p43, %p44
      %p47 = scmp.ne.s32.totalorder %s30, %s46
      %p48 = scmp.eq.s32.totalorder %s22, 0
      %p49 = por %p47, %p48
      %s51 = sadd.s32 %s50, 1
      %p54 = scmp.eq.s32.totalorder %s16, 3
      %p55 = scmp.ne.s32.totalorder %s50, %s52
      %p56 = scmp.eq.s32.totalorder %s16, 0
      %p57 = por %p55, %p56
      %p58 = scmp.ne.s32.totalorder %s50, %s52
      %p59 = scmp.eq.s32.totalorder %s21, 3
      %p60 = por %p58, %p59
      %p61 = scmp.ne.s32.totalorder %s52, %s53
      %p62 = scmp.eq.s32.totalorder %s21, 0
      %p63 = por %p61, %p62
      %p64 = scmp.ne.s32.totalorder %s52, %s53
      %p65 = scmp.eq.s32.totalorder %s22, 3
      %p66 = por %p64, %p65
      %p68 = scmp.ne.s32.totalorder %s53, %s67
      %p69 = scmp.eq.s32.totalorder %s22, 0
      %p70 = por %p68, %p69
      %s72 = sadd.s32 %s71, 1
      %p75 = scmp.eq.s32.totalorder %s16, 3
      %p76 = scmp.ne.s32.totalorder %s71, %s73
      %p77 = scmp.eq.s32.totalorder %s16, 0
      %p78 = por %p76, %p77
      %p79 = scmp.ne.s32.totalorder %s71, %s73
      %p80 = scmp.eq.s32.totalorder %s21, 3
      %p81 = por %p79, %p80
      %p82 = scmp.ne.s32.totalorder %s73, %s74
      %p83 = scmp.eq.s32.totalorder %s21, 0
      %p84 = por %p82, %p83
      %p85 = scmp.ne.s32.totalorder %s73, %s74
      %p86 = scmp.eq.s32.totalorder %s22, 3
      %p87 = por %p85, %p86
      %p89 = scmp.ne.s32.totalorder %s74, %s88
      %p90 = scmp.eq.s32.totalorder %s22, 0
      %p91 = por %p89, %p90
      %s92 = ssub.s32 %s16, %s23
      %p93 = scmp.eq.s32.totalorder %s92, 0
      %s95 = sadd.s32 %s94, 1
      %s96 = scalar_select %p93, %s94, %s95
      %p99 = pneg %p93
      %p100 = scmp.eq.s32.totalorder %s16, 3
      %p101 = por %p99, %p100
      %p102 = scmp.ne.s32.totalorder %s94, %s97
      %p103 = scmp.eq.s32.totalorder %s16, 0
      %p104 = por %p102, %p103
      %p105 = scmp.ne.s32.totalorder %s94, %s97
      %p106 = scmp.eq.s32.totalorder %s21, 3
      %p107 = por %p105, %p106
      %p108 = scmp.ne.s32.totalorder %s97, %s98
      %p109 = scmp.eq.s32.totalorder %s21, 0
      %p110 = por %p108, %p109
      %p111 = scmp.ne.s32.totalorder %s97, %s98
      %p112 = scmp.eq.s32.totalorder %s22, 3
      %p113 = por %p111, %p112
      %p115 = scmp.ne.s32.totalorder %s98, %s114
      %p116 = scmp.eq.s32.totalorder %s22, 0
      %p117 = por %p115, %p116
      %p118 = scmp.le.s32.totalorder 1, %s16
      %p119 = scmp.lt.s32.totalorder %s16, 5
      %p120 = pnand %p118, %p119
      %p121 = pneg %p120
      // Predicated region
      $region9: #{tpu_custom_call.1} parent=5 // pred_check
        _
      $region10: #{tpu_custom_call.1} parent=5 // pred_check_branch
        %123 = sbr.rel (%p120) target = $region12
      $region11: #{tpu_custom_call.1} parent=5 // pred_region
        %s124 = ssub.s32 %s16, 1
        // Predicated region
        $region13: #{tpu_custom_call.1} parent=11 // pred_check
          %p125 = pneg %p63
        $region14: #{tpu_custom_call.1} parent=11 // pred_check_branch
          %127 = sbr.rel (%p125) target = $region16
        $region15: #{tpu_custom_call.1} parent=11 // pred_region
          %s129 = ssub.s32 1024, 1024
          %130 = vsyncadd [#allocation6], %s129
          %s131 = sshll.u32 [#allocation5], 4
          %s132 = int_to_ptr.vmem [resolvable:$true] %s131
          %137 = dma.hbm_to_vmem [thread:$0]  %s1, 1024, %s132, [#allocation6], 64, 64, 4
        $region16: #{tpu_custom_call.1} parent=11 // pred_fallthru
          _
        // Predicated region
        $region17: #{tpu_custom_call.1} parent=11 // pred_check
          %p138 = pneg %p84
        $region18: #{tpu_custom_call.1} parent=11 // pred_check_branch
          %140 = sbr.rel (%p138) target = $region20
        $region19: #{tpu_custom_call.1} parent=11 // pred_region
          _
        $region20: #{tpu_custom_call.1} parent=11 // pred_fallthru
          _
      $region12: #{tpu_custom_call.1} parent=5 // pred_fallthru
        _
      %p141 = scmp.lt.s32.totalorder %s16, 4
      // Predicated region
      $region21: #{tpu_custom_call.1} parent=5 // pred_check
        %p142 = pneg %p141
      $region22: #{tpu_custom_call.1} parent=5 // pred_check_branch
        %144 = sbr.rel (%p142) target = $region24
      $region23: #{tpu_custom_call.1} parent=5 // pred_region
        // Predicated region
        $region25: #{tpu_custom_call.1} parent=23 // pred_check
          %p145 = pneg %p36
        $region26: #{tpu_custom_call.1} parent=23 // pred_check_branch
          %147 = sbr.rel (%p145) target = $region28
        $region27: #{tpu_custom_call.1} parent=23 // pred_region
          %s148 = sand.u32 %s26, 1
          %s149 = scalar_lea.sflag [#allocation3], %s148
          %s150 = sand.u32 %s26, 1
          %s151 = smul.addr %s150, 32
          %s152 = scalar_lea.vmem [#allocation2], %s151
          %s153 = smul.u32 8, %s16
          %s155 = ssub.s32 512, 512
          %156 = vsyncadd %s149, %s155
          %s157 = smul.addr %s153, 64
          %s158 = scalar_lea.hbm %s0, %s157
          %s159 = sshll.u32 %s152, 4
          %s160 = int_to_ptr.vmem [resolvable:$true] %s159
          %165 = dma.hbm_to_vmem [thread:$0]  %s158, 512, %s160, %s149, 64, 64, 4
        $region28: #{tpu_custom_call.1} parent=23 // pred_fallthru
          _
      $region24: #{tpu_custom_call.1} parent=5 // pred_fallthru
        _
      %p166 = scmp.le.s32.totalorder 1, %s16
      %p167 = scmp.lt.s32.totalorder %s16, 5
      %p168 = pnand %p166, %p167
      %p169 = pneg %p168
      // Predicated region
      $region29: #{tpu_custom_call.1} parent=5 // pred_check
        _
      $region30: #{tpu_custom_call.1} parent=5 // pred_check_branch
        %171 = sbr.rel (%p168) target = $region32
      $region31: #{tpu_custom_call.1} parent=5 // pred_region
        %s172 = ssub.s32 %s16, 1
        %s173 = sand.u32 %s29, 1
        %s174 = scalar_lea.sflag [#allocation3], %s173
        %s175 = sand.u32 %s29, 1
        %s176 = smul.addr %s175, 32
        %s177 = scalar_lea.vmem [#allocation2], %s176
        // Predicated region
        $region33: #{tpu_custom_call.1} parent=31 // pred_check
          %p178 = pneg %p42
        $region34: #{tpu_custom_call.1} parent=31 // pred_check_branch
          %180 = sbr.rel (%p178) target = $region36
        $region35: #{tpu_custom_call.1} parent=31 // pred_region
          %181 = dma.done %s174, 512
        $region36: #{tpu_custom_call.1} parent=31 // pred_fallthru
          _
        // Predicated region
        $region37: #{tpu_custom_call.1} parent=31 // pred_check
          %p182 = pneg %p63
        $region38: #{tpu_custom_call.1} parent=31 // pred_check_branch
          %184 = sbr.rel (%p182) target = $region40
        $region39: #{tpu_custom_call.1} parent=31 // pred_region
          %185 = dma.done [#allocation6], 1024
        $region40: #{tpu_custom_call.1} parent=31 // pred_fallthru
          _
        %s186 = sand.u32 %s29, 1
        %s187 = scalar_lea.sflag [#allocation3], %s186
        %s188 = sand.u32 %s29, 1
        %s189 = smul.addr %s188, 32
        %s190 = scalar_lea.vmem [#allocation2], %s189
        %p191 = pneg %p42
        %p192 = pneg %p39
        %p193 = pneg %p63
        %p194 = pneg %p60
        %p195 = pneg %p84
        %p196 = pneg %p81
        %p197 = pneg %p110
        %p198 = pneg %p107
        %s199 = sand.u32 %s97, 1
        %s200 = scalar_lea.sflag [#allocation4], %s199
        %s201 = sand.u32 %s97, 1
        %s202 = smul.addr %s201, 64
        %s203 = scalar_lea.vmem [#allocation7], %s202
        %s204 = smul.u32 8, %s21
        %s205 = smul.u32 8, %s21
        %v207 = vld [vmem:[%s177] sm:$0xf]
        %v208 = vld [vmem:[%s177 + $0x4] sm:$0xf]
        %v209 = vld [vmem:[%s177 + $0x8] sm:$0xf]
        %v210 = vld [vmem:[%s177 + $0xc] sm:$0xf]
        %v211 = vld [vmem:[%s177 + $0x10] sm:$0xf]
        %v212 = vld [vmem:[%s177 + $0x14] sm:$0xf]
        %v213 = vld [vmem:[%s177 + $0x18] sm:$0xf]
        %v214 = vld [vmem:[%s177 + $0x1c] sm:$0xf]
        %v215 = vmax.bf16 %v207, 0
        %v216 = vmax.bf16 %v208, 0
        %v217 = vmax.bf16 %v209, 0
        %v218 = vmax.bf16 %v210, 0
        %v219 = vmax.bf16 %v211, 0
        %v220 = vmax.bf16 %v212, 0
        %v221 = vmax.bf16 %v213, 0
        %v222 = vmax.bf16 %v214, 0
        %v223 = vld [vmem:[#allocation5] sm:$0xf]
        %v224 = vld [vmem:[#allocation5 + $0x4] sm:$0xf]
        %v225 = vld [vmem:[#allocation5 + $0x8] sm:$0xf]
        %v226 = vld [vmem:[#allocation5 + $0xc] sm:$0xf]
        %v227 = vld [vmem:[#allocation5 + $0x10] sm:$0xf]
        %v228 = vld [vmem:[#allocation5 + $0x14] sm:$0xf]
        %v229 = vld [vmem:[#allocation5 + $0x18] sm:$0xf]
        %v230 = vld [vmem:[#allocation5 + $0x1c] sm:$0xf]
        %v231 = vld [vmem:[#allocation5 + $0x20] sm:$0xf]
        %v232 = vld [vmem:[#allocation5 + $0x24] sm:$0xf]
        %v233 = vld [vmem:[#allocation5 + $0x28] sm:$0xf]
        %v234 = vld [vmem:[#allocation5 + $0x2c] sm:$0xf]
        %v235 = vld [vmem:[#allocation5 + $0x30] sm:$0xf]
        %v236 = vld [vmem:[#allocation5 + $0x34] sm:$0xf]
        %v237 = vld [vmem:[#allocation5 + $0x38] sm:$0xf]
        %v238 = vld [vmem:[#allocation5 + $0x3c] sm:$0xf]
        %v239 = vld [vmem:[%s2] sm:$0x1]
        %v241 = vlaneseq
        %v242 = vshrl.u32 %v241, 7
        %v243 = vsub.s32 0, %v242
        %v244 = vrot.slane %v239, %v243
        %v254 = vunpack.c.l.b16 %v215
        %v255 = vunpack.c.l.b16 %v216
        %v256 = vunpack.c.l.b16 %v217
        %v257 = vunpack.c.l.b16 %v218
        %v258 = vunpack.c.l.b16 %v219
        %v259 = vunpack.c.l.b16 %v220
        %v260 = vunpack.c.l.b16 %v221
        %v261 = vunpack.c.l.b16 %v222
        %v262 = vpack.c.b16 %v255, %v254
        %v263 = vpack.c.b16 %v257, %v256
        %v264 = vpack.c.b16 %v259, %v258
        %v265 = vpack.c.b16 %v261, %v260
        %v286 = vunpack.c.l.b16 %v223
        %v287 = vunpack.c.l.b16 %v224
        %v288 = vunpack.c.l.b16 %v225
        %v289 = vunpack.c.l.b16 %v226
        %v290 = vunpack.c.l.b16 %v227
        %v291 = vunpack.c.l.b16 %v228
        %v292 = vunpack.c.l.b16 %v229
        %v293 = vunpack.c.l.b16 %v230
        %v294 = vunpack.c.l.b16 %v231
        %v295 = vunpack.c.l.b16 %v232
        %v296 = vunpack.c.l.b16 %v233
        %v297 = vunpack.c.l.b16 %v234
        %v298 = vunpack.c.l.b16 %v235
        %v299 = vunpack.c.l.b16 %v236
        %v300 = vunpack.c.l.b16 %v237
        %v301 = vunpack.c.l.b16 %v238
        %v302 = vpack.c.b16 %v287, %v286
        %v303 = vpack.c.b16 %v289, %v288
        %v304 = vpack.c.b16 %v291, %v290
        %v305 = vpack.c.b16 %v293, %v292
        %v306 = vpack.c.b16 %v295, %v294
        %v307 = vpack.c.b16 %v297, %v296
        %v308 = vpack.c.b16 %v299, %v298
        %v309 = vpack.c.b16 %v301, %v300
        %318 = vmatprep.subr.bf16.mxu0 0
        %319 = vmatpush1.bf16.msra.mxu0 %v302
        %320 = vmatprep.subr.bf16.mxu0 0
        %321 = vmatpush1.bf16.msra.mxu0 %v303
        %322 = vmatprep.subr.bf16.mxu0 0
        %323 = vmatpush1.bf16.msra.mxu0 %v304
        %324 = vmatprep.subr.bf16.mxu0 0
        %325 = vmatpush1.bf16.msra.mxu0 %v305
        %326 = vmatprep.subr.bf16.mxu0 0
        %327 = vmatpush1.bf16.msra.mxu0 %v306
        %328 = vmatprep.subr.bf16.mxu0 0
        %329 = vmatpush1.bf16.msra.mxu0 %v307
        %330 = vmatprep.subr.bf16.mxu0 0
        %331 = vmatpush1.bf16.msra.mxu0 %v308
        %332 = vmatprep.subr.bf16.mxu0 0
        %333 = vmatpush1.bf16.msra.mxu0 %v309
        %334 = vmatprep.subr.bf16.mxu0 0
        %335 = vmatpush1.bf16.msra.mxu0 0
        %336 = vmatprep.subr.bf16.mxu0 0
        %337 = vmatpush1.bf16.msra.mxu0 0
        %338 = vmatprep.subr.bf16.mxu0 0
        %339 = vmatpush1.bf16.msra.mxu0 0
        %340 = vmatprep.subr.bf16.mxu0 0
        %341 = vmatpush1.bf16.msra.mxu0 0
        %342 = vmatprep.subr.bf16.mxu0 0
        %343 = vmatpush1.bf16.msra.mxu0 0
        %344 = vmatprep.subr.bf16.mxu0 0
        %345 = vmatpush1.bf16.msra.mxu0 0
        %346 = vmatprep.subr.bf16.mxu0 0
        %347 = vmatpush1.bf16.msra.mxu0 0
        %348 = vmatprep.subr.bf16.mxu0 0
        %349 = vmatpush1.bf16.msra.mxu0 0
        %350 = vmatprep.mubr.bf16.mxu0 0
        %351 = vmatmul.mubr.bf16.gmra.mrb[0].mxu0 %v262
        %v352 = vpop.f32.mrb[0].mxu0
        %v353 = vadd.f32 %v244, %v352
        %v354 = vpop.f32.mrb[0].mxu0
        %v355 = vpop.f32.mrb[0].mxu0
        %v356 = vadd.f32 %v244, %v355
        %v357 = vpop.f32.mrb[0].mxu0
        %358 = vmatprep.mubr.bf16.mxu0 0
        %359 = vmatmul.mubr.bf16.gmra.mrb[0].mxu0 %v263
        %v360 = vpop.f32.mrb[0].mxu0
        %v361 = vadd.f32 %v244, %v360
        %v362 = vpop.f32.mrb[0].mxu0
        %v363 = vpop.f32.mrb[0].mxu0
        %v364 = vadd.f32 %v244, %v363
        %v365 = vpop.f32.mrb[0].mxu0
        %366 = vmatprep.mubr.bf16.mxu0 0
        %367 = vmatmul.mubr.bf16.gmra.mrb[0].mxu0 %v264
        %v368 = vpop.f32.mrb[0].mxu0
        %v369 = vadd.f32 %v244, %v368
        %v370 = vpop.f32.mrb[0].mxu0
        %v371 = vpop.f32.mrb[0].mxu0
        %v372 = vadd.f32 %v244, %v371
        %v373 = vpop.f32.mrb[0].mxu0
        %374 = vmatprep.mubr.bf16.mxu0 0
        %375 = vmatmul.mubr.bf16.gmra.mrb[0].mxu0 %v265
        %v376 = vpop.f32.mrb[0].mxu0
        %v377 = vadd.f32 %v244, %v376
        %v378 = vpop.f32.mrb[0].mxu0
        %v379 = vpop.f32.mrb[0].mxu0
        %v380 = vadd.f32 %v244, %v379
        %v381 = vpop.f32.mrb[0].mxu0
        %382 = vdwg.mxu0
        %383 = vst [vmem:[%s203] sm:$0xff] %v353
        %384 = vst [vmem:[%s203 + $0x8] sm:$0xff] %v356
        %385 = vst [vmem:[%s203 + $0x10] sm:$0xff] %v361
        %386 = vst [vmem:[%s203 + $0x18] sm:$0xff] %v364
        %387 = vst [vmem:[%s203 + $0x20] sm:$0xff] %v369
        %388 = vst [vmem:[%s203 + $0x28] sm:$0xff] %v372
        %389 = vst [vmem:[%s203 + $0x30] sm:$0xff] %v377
        %390 = vst [vmem:[%s203 + $0x38] sm:$0xff] %v380
        %s391 = sand.u32 %s97, 1
        %s392 = scalar_lea.sflag [#allocation4], %s391
        %s393 = sand.u32 %s97, 1
        %s394 = smul.addr %s393, 64
        %s395 = scalar_lea.vmem [#allocation7], %s394
        // Predicated region
        $region41: #{tpu_custom_call.1} parent=31 // pred_check
          %p396 = pneg %p107
        $region42: #{tpu_custom_call.1} parent=31 // pred_check_branch
          %398 = sbr.rel (%p396) target = $region44
        $region43: #{tpu_custom_call.1} parent=31 // pred_region
          %s399 = smul.u32 8, %s21
          %s401 = ssub.s32 1024, 1024
          %402 = vsyncadd %s392, %s401
          %s403 = smul.addr %s399, 128
          %s404 = scalar_lea.hbm %s3, %s403
          %s405 = sshll.u32 %s395, 4
          %s406 = int_to_ptr.vmem [resolvable:$true] %s405
          %411 = dma.vmem_to_hbm [thread:$0]  %s406, 1024, %s404, %s392, 128, 128, 8
        $region44: #{tpu_custom_call.1} parent=31 // pred_fallthru
          _
      $region32: #{tpu_custom_call.1} parent=5 // pred_fallthru
        _
      %p412 = scmp.le.s32.totalorder 2, %s16
      // Predicated region
      $region45: #{tpu_custom_call.1} parent=5 // pred_check
        %p413 = pneg %p412
      $region46: #{tpu_custom_call.1} parent=5 // pred_check_branch
        %415 = sbr.rel (%p413) target = $region48
      $region47: #{tpu_custom_call.1} parent=5 // pred_region
        %s416 = ssub.s32 %s16, 2
        // Predicated region
        $region49: #{tpu_custom_call.1} parent=47 // pred_check
          %p417 = pneg %p113
        $region50: #{tpu_custom_call.1} parent=47 // pred_check_branch
          %419 = sbr.rel (%p417) target = $region52
        $region51: #{tpu_custom_call.1} parent=47 // pred_region
          %s420 = sand.u32 %s98, 1
          %s421 = scalar_lea.sflag [#allocation4], %s420
          %s422 = sand.u32 %s98, 1
          %s423 = smul.addr %s422, 64
          %s424 = scalar_lea.vmem [#allocation7], %s423
          %425 = dma.done %s421, 1024
        $region52: #{tpu_custom_call.1} parent=47 // pred_fallthru
          _
      $region48: #{tpu_custom_call.1} parent=5 // pred_fallthru
        _
    $region6: #{tpu_custom_call.1} parent=1 // loop_footer
      %s20 = sadd.s32 1, %s16
    $region7: #{tpu_custom_call.1} parent=1 // loop_footer_branch
      %15 = sbr.rel target = $region3
    $region8: #{tpu_custom_call.1} parent=1 // loop_exit
      _
    %426 = vsyncpa [#allocation3], 1
    %s427 = scalar_lea.sflag [#allocation3], 1
    %428 = vsyncpa %s427, 1
    %429 = vsyncpa [#allocation6], 1
    %430 = vsyncpa [#allocation4], 1
    %s431 = scalar_lea.sflag [#allocation4], 1
    %432 = vsyncpa %s431, 1

</llo_original>
